<compile_context>
chip_gen: v6e
topology: v6e:2x2x1
jax: 0.10.0
libtpu: 0.0.40
codegen_flags: <defaults>
</compile_context>

<pallas_src>
import functools

import jax
import jax.numpy as jnp
from jax.experimental import pallas as pl
from jax.experimental.pallas import tpu as pltpu

LANES = 128
SUBLANES = 8
DEFAULT_MAX_BLOCK_ROWS = 2048  # 2048x128 f32 = 1 MiB per input per grid step


def _min_row_tile(dtype) -> int:
    """Native sublane tile: 8 rows for 4-byte, 16 for 2-byte, 32 for 1-byte."""
    itemsize = jnp.dtype(dtype).itemsize
    return 8 * max(1, 4 // itemsize)


def _dice_partial_kernel(i_ref, t_ref, inter_ref, a_ref, b_ref, *,
                         block_rows, rows, steps_per_core, needs_mask):
    """Accumulate per-core (8, 128) partial sums for the three reductions."""
    s = pl.program_id(1)

    # Each core's resident output block is its accumulator: init at s == 0.
    @pl.when(s == 0)
    def _():
        inter_ref[...] = jnp.zeros_like(inter_ref)
        a_ref[...] = jnp.zeros_like(a_ref)
        b_ref[...] = jnp.zeros_like(b_ref)

    x = i_ref[...].astype(jnp.float32)
    y = t_ref[...].astype(jnp.float32)

    if needs_mask:
        # Zero out rows beyond the real array: covers both the ragged last
        # block and phantom steps (whose block index was clamped in index_map).
        blk = pl.program_id(0) * steps_per_core + s
        row_ids = blk * block_rows + jax.lax.broadcasted_iota(
            jnp.int32, (block_rows, LANES), 0)
        valid = row_ids < rows
        x = jnp.where(valid, x, 0.0)
        y = jnp.where(valid, y, 0.0)

    groups = block_rows // SUBLANES
    # Pure-VPU accumulation: collapse the leading (untiled) axis with vreg
    # adds into the vreg-shaped (8, 128) running sums. No per-step XLU /
    # scalar reduction.
    inter_ref[0] += (x * y).reshape(groups, SUBLANES, LANES).sum(axis=0)
    a_ref[0] += (x * x).reshape(groups, SUBLANES, LANES).sum(axis=0)
    b_ref[0] += (y * y).reshape(groups, SUBLANES, LANES).sum(axis=0)


def dice_loss(inputs: jax.Array, targets: jax.Array, smooth: float = 1.0,
              max_block_rows: int = DEFAULT_MAX_BLOCK_ROWS) -> jax.Array:
    """Pallas TPU implementation of DiceLoss.forward. Returns a scalar f32."""
    # Flatten row-major (same ordering as torch .contiguous().view(-1)).
    # No dtype cast here: the kernel casts per-block, so HBM traffic stays at
    # the input's native width.
    iflat = jnp.reshape(inputs, (-1,))
    tflat = jnp.reshape(targets, (-1,))
    n = iflat.shape[0]

    row_mult = max(_min_row_tile(iflat.dtype), _min_row_tile(tflat.dtype))
    elem_mult = row_mult * LANES
    n_pad = (-(-n // elem_mult)) * elem_mult
    if n_pad != n:
        # Only pad up to the minimal hardware tile (exact: zeros contribute 0
        # to all three sums). Block-level raggedness is masked in-kernel, so
        # no full-block padding is ever done. Skipped entirely for
        # tile-multiple sizes (the common case).
        iflat = jnp.pad(iflat, (0, n_pad - n))
        tflat = jnp.pad(tflat, (0, n_pad - n))

    rows = n_pad // LANES
    i2d = iflat.reshape(rows, LANES)
    t2d = tflat.reshape(rows, LANES)

    # Block sizing: as big as possible (amortize per-step overhead) while
    # respecting the dtype sublane multiple and scoped-VMEM limits.
    block_rows = min(rows, max(row_mult, (max_block_rows // row_mult) * row_mult))
    total_blocks = -(-rows // block_rows)
    num_cores = 2 if total_blocks >= 2 else 1   # v7x megacore split
    steps_per_core = -(-total_blocks // num_cores)
    needs_mask = (total_blocks * block_rows != rows) or (
        num_cores * steps_per_core != total_blocks)

    def in_map(p, s):
        # Clamp so phantom trailing steps never request an out-of-range block;
        # their contribution is zeroed by the in-kernel mask.
        return (jnp.minimum(p * steps_per_core + s, total_blocks - 1), 0)

    kernel = functools.partial(
        _dice_partial_kernel,
        block_rows=block_rows, rows=rows,
        steps_per_core=steps_per_core, needs_mask=needs_mask)

    part_shape = jax.ShapeDtypeStruct((num_cores, SUBLANES, LANES), jnp.float32)
    out_spec = pl.BlockSpec((1, SUBLANES, LANES), lambda p, s: (p, 0, 0))

    inter_p, a_p, b_p = pl.pallas_call(
        kernel,
        out_shape=(part_shape, part_shape, part_shape),
        grid_spec=pltpu.PrefetchScalarGridSpec(
            num_scalar_prefetch=0,
            grid=(num_cores, steps_per_core),
            in_specs=[
                pl.BlockSpec((block_rows, LANES), in_map),
                pl.BlockSpec((block_rows, LANES), in_map),
            ],
            out_specs=[out_spec, out_spec, out_spec],
        ),
        compiler_params=pltpu.CompilerParams(
            dimension_semantics=("parallel", "arbitrary"),
        ),
    )(i2d, t2d)

    # Final (one-time) cross-lane/sublane/core reduction + dice formula on
    # tiny (num_cores, 8, 128) partials — negligible XLA work.
    smooth_f = jnp.float32(smooth)
    intersection = jnp.sum(inter_p)
    a_sum = jnp.sum(a_p)
    b_sum = jnp.sum(b_p)
    return jnp.float32(1.0) - (2.0 * intersection + smooth_f) / (a_sum + b_sum + smooth_f)


def _dice_loss_ref(inputs, targets, smooth=1.0):
    iflat = jnp.reshape(inputs, (-1,)).astype(jnp.float32)
    tflat = jnp.reshape(targets, (-1,)).astype(jnp.float32)
    intersection = jnp.sum(iflat * tflat)
    a_sum = jnp.sum(iflat * iflat)
    b_sum = jnp.sum(tflat * tflat)
    return 1.0 - (2.0 * intersection + smooth) / (a_sum + b_sum + smooth)


if __name__ == "__main__":
    key = jax.random.PRNGKey(0)
    k_in, k_tg, k_in2, k_tg2 = jax.random.split(key, 4)

    # NCHW, small shapes: batch=2, channels=4, spatial=16x16 (single block).
    inputs = jax.random.uniform(k_in, (2, 4, 16, 16), dtype=jnp.float32)
    targets = (jax.random.uniform(k_tg, (2, 4, 16, 16)) > 0.5).astype(jnp.float32)

    loss = jax.block_until_ready(dice_loss(inputs, targets, smooth=1.0))
    ref = jax.block_until_ready(_dice_loss_ref(inputs, targets, smooth=1.0))
    assert loss.shape == ()
    assert jnp.allclose(loss, ref, atol=1e-6, rtol=1e-6), (loss, ref)

    # Second check: ragged size that exercises padding, the in-kernel mask,
    # multi-block grid, phantom-step clamping, and the 2-core partial sums
    # (small max_block_rows forces the multi-block path at tiny cost).
    inputs2 = jax.random.uniform(k_in2, (2, 3, 17, 23), dtype=jnp.float32)
    targets2 = (jax.random.uniform(k_tg2, (2, 3, 17, 23)) > 0.5).astype(jnp.float32)

    loss2 = jax.block_until_ready(
        dice_loss(inputs2, targets2, smooth=1.0, max_block_rows=8))
    ref2 = jax.block_until_ready(_dice_loss_ref(inputs2, targets2, smooth=1.0))
    assert loss2.shape == ()
    assert jnp.allclose(loss2, ref2, atol=1e-6, rtol=1e-6), (loss2, ref2)

    print("KERNEL_OK")
</pallas_src>

<mosaic_0001>
module attributes {stable_mosaic.version = 11 : i64} {
  func.func @_dice_partial_kernel(%arg0: i32, %arg1: i32, %arg2: memref<16x128xf32, #tpu.memory_space<vmem>>, %arg3: memref<16x128xf32, #tpu.memory_space<vmem>>, %arg4: memref<1x8x128xf32, #tpu.memory_space<vmem>>, %arg5: memref<1x8x128xf32, #tpu.memory_space<vmem>>, %arg6: memref<1x8x128xf32, #tpu.memory_space<vmem>>) attributes {dimension_semantics = [#tpu.dimension_semantics<parallel>, #tpu.dimension_semantics<arbitrary>], iteration_bounds = array<i64: 1, 1>, scalar_prefetch = 0 : i64, scratch_operands = 0 : i64, tpu.core_type = #tpu.core_type<tc>, window_params = [{transform_indices = @transform_0, window_bounds = array<i64: 16, 128>}, {transform_indices = @transform_1, window_bounds = array<i64: 16, 128>}, {transform_indices = @transform_2, window_bounds = array<i64: 1, 8, 128>}, {transform_indices = @transform_3, window_bounds = array<i64: 1, 8, 128>}, {transform_indices = @transform_4, window_bounds = array<i64: 1, 8, 128>}]} {
    %c0_i32 = arith.constant 0 : i32
    %0 = arith.cmpi eq, %arg1, %c0_i32 : i32
    %1 = arith.extui %0 : i1 to i32
    %c0_i32_0 = arith.constant 0 : i32
    %2 = arith.cmpi ne, %1, %c0_i32_0 : i32
    scf.if %2 {
      %cst_24 = arith.constant 0.000000e+00 : f32
      %32 = vector.broadcast %cst_24 : f32 to vector<1x8x128xf32>
      %c0_25 = arith.constant 0 : index
      %c0_26 = arith.constant 0 : index
      %c0_27 = arith.constant 0 : index
      %33 = vector.load %arg4[%c0_25, %c0_26, %c0_27] : memref<1x8x128xf32, #tpu.memory_space<vmem>>, vector<1x8x128xf32>
      tpu.vector_store %arg4[%c0_25, %c0_26, %c0_27], %32 {strides = array<i32>} : memref<1x8x128xf32, #tpu.memory_space<vmem>>, vector<1x8x128xf32>,
      %cst_28 = arith.constant 0.000000e+00 : f32
      %34 = vector.broadcast %cst_28 : f32 to vector<1x8x128xf32>
      %c0_29 = arith.constant 0 : index
      %c0_30 = arith.constant 0 : index
      %c0_31 = arith.constant 0 : index
      %35 = vector.load %arg5[%c0_29, %c0_30, %c0_31] : memref<1x8x128xf32, #tpu.memory_space<vmem>>, vector<1x8x128xf32>
      tpu.vector_store %arg5[%c0_29, %c0_30, %c0_31], %34 {strides = array<i32>} : memref<1x8x128xf32, #tpu.memory_space<vmem>>, vector<1x8x128xf32>,
      %cst_32 = arith.constant 0.000000e+00 : f32
      %36 = vector.broadcast %cst_32 : f32 to vector<1x8x128xf32>
      %c0_33 = arith.constant 0 : index
      %c0_34 = arith.constant 0 : index
      %c0_35 = arith.constant 0 : index
      %37 = vector.load %arg6[%c0_33, %c0_34, %c0_35] : memref<1x8x128xf32, #tpu.memory_space<vmem>>, vector<1x8x128xf32>
      tpu.vector_store %arg6[%c0_33, %c0_34, %c0_35], %36 {strides = array<i32>} : memref<1x8x128xf32, #tpu.memory_space<vmem>>, vector<1x8x128xf32>,
    } else {
    }
    %c0 = arith.constant 0 : index
    %c0_1 = arith.constant 0 : index
    %3 = vector.load %arg2[%c0, %c0_1] : memref<16x128xf32, #tpu.memory_space<vmem>>, vector<16x128xf32>
    %c0_2 = arith.constant 0 : index
    %c0_3 = arith.constant 0 : index
    %4 = vector.load %arg3[%c0_2, %c0_3] : memref<16x128xf32, #tpu.memory_space<vmem>>, vector<16x128xf32>
    %c0_4 = arith.constant 0 : index
    %c0_5 = arith.constant 0 : index
    %c0_6 = arith.constant 0 : index
    %5 = vector.load %arg4[%c0_4, %c0_5, %c0_6] : memref<1x8x128xf32, #tpu.memory_space<vmem>>, vector<1x8x128xf32>
    %6 = vector.shape_cast %5 : vector<1x8x128xf32> to vector<8x128xf32>
    %7 = arith.mulf %3, %4 : vector<16x128xf32>
    %8 = vector.shape_cast %7 : vector<16x128xf32> to vector<2x8x128xf32>
    %cst = arith.constant dense<0.000000e+00> : vector<8x128xf32>
    %9 = vector.multi_reduction <add>, %8, %cst [0] : vector<2x8x128xf32> to vector<8x128xf32>
    %10 = arith.addf %6, %9 : vector<8x128xf32>
    %c0_7 = arith.constant 0 : index
    %c0_8 = arith.constant 0 : index
    %c0_9 = arith.constant 0 : index
    %11 = vector.load %arg4[%c0_7, %c0_8, %c0_9] : memref<1x8x128xf32, #tpu.memory_space<vmem>>, vector<1x8x128xf32>
    %12 = vector.shape_cast %11 : vector<1x8x128xf32> to vector<8x128xf32>
    %13 = vector.shape_cast %10 : vector<8x128xf32> to vector<1x8x128xf32>
    tpu.vector_store %arg4[%c0_7, %c0_8, %c0_9], %13 {strides = array<i32>} : memref<1x8x128xf32, #tpu.memory_space<vmem>>, vector<1x8x128xf32>,
    %c0_10 = arith.constant 0 : index
    %c0_11 = arith.constant 0 : index
    %c0_12 = arith.constant 0 : index
    %14 = vector.load %arg5[%c0_10, %c0_11, %c0_12] : memref<1x8x128xf32, #tpu.memory_space<vmem>>, vector<1x8x128xf32>
    %15 = vector.shape_cast %14 : vector<1x8x128xf32> to vector<8x128xf32>
    %16 = arith.mulf %3, %3 : vector<16x128xf32>
    %17 = vector.shape_cast %16 : vector<16x128xf32> to vector<2x8x128xf32>
    %cst_13 = arith.constant dense<0.000000e+00> : vector<8x128xf32>
    %18 = vector.multi_reduction <add>, %17, %cst_13 [0] : vector<2x8x128xf32> to vector<8x128xf32>
    %19 = arith.addf %15, %18 : vector<8x128xf32>
    %c0_14 = arith.constant 0 : index
    %c0_15 = arith.constant 0 : index
    %c0_16 = arith.constant 0 : index
    %20 = vector.load %arg5[%c0_14, %c0_15, %c0_16] : memref<1x8x128xf32, #tpu.memory_space<vmem>>, vector<1x8x128xf32>
    %21 = vector.shape_cast %20 : vector<1x8x128xf32> to vector<8x128xf32>
    %22 = vector.shape_cast %19 : vector<8x128xf32> to vector<1x8x128xf32>
    tpu.vector_store %arg5[%c0_14, %c0_15, %c0_16], %22 {strides = array<i32>} : memref<1x8x128xf32, #tpu.memory_space<vmem>>, vector<1x8x128xf32>,
    %c0_17 = arith.constant 0 : index
    %c0_18 = arith.constant 0 : index
    %c0_19 = arith.constant 0 : index
    %23 = vector.load %arg6[%c0_17, %c0_18, %c0_19] : memref<1x8x128xf32, #tpu.memory_space<vmem>>, vector<1x8x128xf32>
    %24 = vector.shape_cast %23 : vector<1x8x128xf32> to vector<8x128xf32>
    %25 = arith.mulf %4, %4 : vector<16x128xf32>
    %26 = vector.shape_cast %25 : vector<16x128xf32> to vector<2x8x128xf32>
    %cst_20 = arith.constant dense<0.000000e+00> : vector<8x128xf32>
    %27 = vector.multi_reduction <add>, %26, %cst_20 [0] : vector<2x8x128xf32> to vector<8x128xf32>
    %28 = arith.addf %24, %27 : vector<8x128xf32>
    %c0_21 = arith.constant 0 : index
    %c0_22 = arith.constant 0 : index
    %c0_23 = arith.constant 0 : index
    %29 = vector.load %arg6[%c0_21, %c0_22, %c0_23] : memref<1x8x128xf32, #tpu.memory_space<vmem>>, vector<1x8x128xf32>
    %30 = vector.shape_cast %29 : vector<1x8x128xf32> to vector<8x128xf32>
    %31 = vector.shape_cast %28 : vector<8x128xf32> to vector<1x8x128xf32>
    tpu.vector_store %arg6[%c0_21, %c0_22, %c0_23], %31 {strides = array<i32>} : memref<1x8x128xf32, #tpu.memory_space<vmem>>, vector<1x8x128xf32>,
    return
  }
  func.func @transform_0(%arg0: i32, %arg1: i32) -> (i32, i32) {
    %c1_i32 = arith.constant 1 : i32
    %0 = arith.muli %arg0, %c1_i32 : i32
    %1 = arith.addi %0, %arg1 : i32
    %c0_i32 = arith.constant 0 : i32
    %2 = arith.minsi %1, %c0_i32 : i32
    %c0_i32_0 = arith.constant 0 : i32
    %c0_i32_1 = arith.constant 0 : i32
    return %2, %c0_i32_0 : i32, i32
  }
  func.func @transform_1(%arg0: i32, %arg1: i32) -> (i32, i32) {
    %c1_i32 = arith.constant 1 : i32
    %0 = arith.muli %arg0, %c1_i32 : i32
    %1 = arith.addi %0, %arg1 : i32
    %c0_i32 = arith.constant 0 : i32
    %2 = arith.minsi %1, %c0_i32 : i32
    %c0_i32_0 = arith.constant 0 : i32
    %c0_i32_1 = arith.constant 0 : i32
    return %2, %c0_i32_0 : i32, i32
  }
  func.func @transform_2(%arg0: i32, %arg1: i32) -> (i32, i32, i32) {
    %c0_i32 = arith.constant 0 : i32
    %c0_i32_0 = arith.constant 0 : i32
    %c0_i32_1 = arith.constant 0 : i32
    return %arg0, %c0_i32, %c0_i32_0 : i32, i32, i32
  }
  func.func @transform_3(%arg0: i32, %arg1: i32) -> (i32, i32, i32) {
    %c0_i32 = arith.constant 0 : i32
    %c0_i32_0 = arith.constant 0 : i32
    %c0_i32_1 = arith.constant 0 : i32
    return %arg0, %c0_i32, %c0_i32_0 : i32, i32, i32
  }
  func.func @transform_4(%arg0: i32, %arg1: i32) -> (i32, i32, i32) {
    %c0_i32 = arith.constant 0 : i32
    %c0_i32_0 = arith.constant 0 : i32
    %c0_i32_1 = arith.constant 0 : i32
    return %arg0, %c0_i32, %c0_i32_0 : i32, i32, i32
  }
}

</mosaic_0001>

<llo_original>
// kernel: tpu_custom_call.1
$region0: #{tpu_custom_call.1}
  #allocation0 [shape = 'u32[]', space=smem, size = 0x4, offset = 0x4, fixed_abs, tag = 'smem constant byte address 0x4 - core index']
  #allocation1 [shape = 'u32[144,128]{1,0:T(1,128)}', space=vmem, size = 0x12000, scoped, tag = 'internal scratch']
  %s0 = inlined_call_operand.hbm [shape: f32[16,128], index: 0, kind: input, shape index: {}]
  %s1 = inlined_call_operand.hbm [shape: f32[16,128], index: 1, kind: input, shape index: {}]
  %s2 = inlined_call_operand.hbm [shape: f32[1,8,128], index: 2, kind: output, shape index: {0}]
  %s3 = inlined_call_operand.hbm [shape: f32[1,8,128], index: 3, kind: output, shape index: {1}]
  %s4 = inlined_call_operand.hbm [shape: f32[1,8,128], index: 4, kind: output, shape index: {2}]
  %5 = xla_tuple %s2, %s3, %s4
  %s6 = sld [smem:[#allocation0]]
  $region46: #{tpu_custom_call.1} parent=0
    _
  %s8 = ssub.s32 1, %s6
  %s9 = scalar_select 0, %s8, %s6
  $region1: #{tpu_custom_call.1} parent=0
    #allocation2 [shape = 'u8[8192]{0}', space=vmem, size = 0x2000, scoped, tag = 'input window, operand 0, single buffered']
    #allocation3 [shape = 's32[1]{0}', space=sflag, size = 0x4, scoped, tag = 'scoped memory for tpu_custom_call.1']
    #allocation4 [shape = 's32[1]{0}', space=sflag, size = 0x4, scoped, tag = 'scoped memory for tpu_custom_call.1']
    #allocation5 [shape = 'u8[8192]{0}', space=vmem, size = 0x2000, scoped, tag = 'input window, operand 1, single buffered']
    #allocation6 [shape = 's32[1]{0}', space=sflag, size = 0x4, scoped, tag = 'scoped memory for tpu_custom_call.1']
    #allocation7 [shape = 'u8[4096]{0}', space=vmem, size = 0x1000, scoped, tag = 'output window, operand 0, single buffered']
    #allocation8 [shape = 'u8[4096]{0}', space=vmem, size = 0x1000, scoped, tag = 'output window, operand 1, single buffered']
    #allocation9 [shape = 's32[1]{0}', space=sflag, size = 0x4, scoped, tag = 'scoped memory for tpu_custom_call.1']
    #allocation10 [shape = 'u8[4096]{0}', space=vmem, size = 0x1000, scoped, tag = 'output window, operand 2, single buffered']
    %10 = vsyncpa [#allocation3], 0
    %11 = vsyncpa [#allocation6], 0
    %12 = vsyncpa [#allocation4], 0
    %13 = vsyncpa [#allocation9], 0
    // Predicated region
    $region2: #{tpu_custom_call.1} parent=1 // pred_check
      _
    $region3: #{tpu_custom_call.1} parent=1 // pred_check_branch
      %15 = sbr.rel (0) target = $region5
    $region4: #{tpu_custom_call.1} parent=1 // pred_region
      %s16 = sadd.s32 0, 0
      %p17 = scmp.lt.s32.totalorder %s16, 0
      %s18 = scalar_select %p17, %s16, 0
      %s19 = smul.u32 2, %s18
      %s21 = ssub.s32 256, 256
      %22 = vsyncadd [#allocation3], %s21
      %s23 = smul.addr %s19, 128
      %s24 = scalar_lea.hbm %s0, %s23
      %s25 = sshll.u32 [#allocation2], 4
      %s26 = int_to_ptr.vmem [resolvable:$true] %s25
      %31 = dma.hbm_to_vmem [thread:$0]  %s24, 256, %s26, [#allocation3], 128, 128, 8
    $region5: #{tpu_custom_call.1} parent=1 // pred_fallthru
      _
    // Predicated region
    $region6: #{tpu_custom_call.1} parent=1 // pred_check
      _
    $region7: #{tpu_custom_call.1} parent=1 // pred_check_branch
      %33 = sbr.rel (0) target = $region9
    $region8: #{tpu_custom_call.1} parent=1 // pred_region
      %s34 = sadd.s32 0, 0
      %p35 = scmp.lt.s32.totalorder %s34, 0
      %s36 = scalar_select %p35, %s34, 0
      %s37 = smul.u32 2, %s36
      %s39 = ssub.s32 256, 256
      %40 = vsyncadd [#allocation6], %s39
      %s41 = smul.addr %s37, 128
      %s42 = scalar_lea.hbm %s1, %s41
      %s43 = sshll.u32 [#allocation5], 4
      %s44 = int_to_ptr.vmem [resolvable:$true] %s43
      %49 = dma.hbm_to_vmem [thread:$0]  %s42, 256, %s44, [#allocation6], 128, 128, 8
    $region9: #{tpu_custom_call.1} parent=1 // pred_fallthru
      _
    // Predicated region
    $region10: #{tpu_custom_call.1} parent=1 // pred_check
      _
    $region11: #{tpu_custom_call.1} parent=1 // pred_check_branch
      %51 = sbr.rel (0) target = $region13
    $region12: #{tpu_custom_call.1} parent=1 // pred_region
      %52 = dma.done [#allocation3], 256
    $region13: #{tpu_custom_call.1} parent=1 // pred_fallthru
      _
    // Predicated region
    $region14: #{tpu_custom_call.1} parent=1 // pred_check
      _
    $region15: #{tpu_custom_call.1} parent=1 // pred_check_branch
      %54 = sbr.rel (0) target = $region17
    $region16: #{tpu_custom_call.1} parent=1 // pred_region
      %55 = dma.done [#allocation6], 256
    $region17: #{tpu_custom_call.1} parent=1 // pred_fallthru
      _
    %s56 = sadd.s32 0, 0
    %p57 = scmp.lt.s32.totalorder %s56, 0
    %s58 = scalar_select %p57, %s56, 0
    %s59 = smul.u32 2, %s58
    %s60 = sadd.s32 0, 0
    %p61 = scmp.lt.s32.totalorder %s60, 0
    %s62 = scalar_select %p61, %s60, 0
    %s63 = smul.u32 2, %s62
    %p64 = scmp.eq.s32.totalorder 0, 0
    // Predicated region
    $region18: #{tpu_custom_call.1} parent=1 // pred_check
      %p65 = pneg %p64
    $region19: #{tpu_custom_call.1} parent=1 // pred_check_branch
      %67 = sbr.rel (%p65) target = $region21
    $region20: #{tpu_custom_call.1} parent=1 // pred_region
      %68 = vst [vmem:[#allocation7] sm:$0xff] 0.0
      %69 = vst [vmem:[#allocation8] sm:$0xff] 0.0
      %70 = vst [vmem:[#allocation10] sm:$0xff] 0.0
    $region21: #{tpu_custom_call.1} parent=1 // pred_fallthru
      _
    %v71 = vld [vmem:[#allocation2] sm:$0xff]
    %v72 = vld [vmem:[#allocation2 + $0x8] sm:$0xff]
    %v73 = vld [vmem:[#allocation5] sm:$0xff]
    %v74 = vld [vmem:[#allocation5 + $0x8] sm:$0xff]
    %v75 = vld [vmem:[#allocation7] sm:$0xff]
    %v76 = vmul.f32 %v71, %v73
    %v77 = vmul.f32 %v72, %v74
    %v78 = vadd.f32 %v76, %v77
    %v79 = vadd.f32 %v75, %v78
    %80 = vst [vmem:[#allocation7] sm:$0xff] %v79
    %v81 = vld [vmem:[#allocation8] sm:$0xff]
    %v82 = vmul.f32 %v71, %v71
    %v83 = vmul.f32 %v72, %v72
    %v84 = vadd.f32 %v82, %v83
    %v85 = vadd.f32 %v81, %v84
    %86 = vst [vmem:[#allocation8] sm:$0xff] %v85
    %v87 = vld [vmem:[#allocation10] sm:$0xff]
    %v88 = vmul.f32 %v73, %v73
    %v89 = vmul.f32 %v74, %v74
    %v90 = vadd.f32 %v88, %v89
    %v91 = vadd.f32 %v87, %v90
    %92 = vst [vmem:[#allocation10] sm:$0xff] %v91
    // Predicated region
    $region22: #{tpu_custom_call.1} parent=1 // pred_check
      _
    $region23: #{tpu_custom_call.1} parent=1 // pred_check_branch
      %94 = sbr.rel (0) target = $region25
    $region24: #{tpu_custom_call.1} parent=1 // pred_region
      %s96 = ssub.s32 128, 128
      %97 = vsyncadd [#allocation4], %s96
      %s99 = sshll.u32 [#allocation7], 4
      %s100 = int_to_ptr.vmem [resolvable:$true] %s99
      %102 = dma.vmem_to_hbm [thread:$0]  %s100, 128, %s2, [#allocation4]
    $region25: #{tpu_custom_call.1} parent=1 // pred_fallthru
      _
    // Predicated region
    $region26: #{tpu_custom_call.1} parent=1 // pred_check
      _
    $region27: #{tpu_custom_call.1} parent=1 // pred_check_branch
      %104 = sbr.rel (0) target = $region29
    $region28: #{tpu_custom_call.1} parent=1 // pred_region
      %s106 = ssub.s32 128, 128
      %107 = vsyncadd [#allocation9], %s106
      %s109 = sshll.u32 [#allocation8], 4
      %s110 = int_to_ptr.vmem [resolvable:$true] %s109
      %112 = dma.vmem_to_hbm [thread:$0]  %s110, 128, %s3, [#allocation9]
    $region29: #{tpu_custom_call.1} parent=1 // pred_fallthru
      _
    // Predicated region
    $region30: #{tpu_custom_call.1} parent=1 // pred_check
      _
    $region31: #{tpu_custom_call.1} parent=1 // pred_check_branch
      %114 = sbr.rel (0) target = $region33
    $region32: #{tpu_custom_call.1} parent=1 // pred_region
      %s116 = ssub.s32 128, 128
      %117 = vsyncadd [#allocation9], %s116
      %s119 = sshll.u32 [#allocation10], 4
      %s120 = int_to_ptr.vmem [resolvable:$true] %s119
      %122 = dma.vmem_to_hbm [thread:$0]  %s120, 128, %s4, [#allocation9]
    $region33: #{tpu_custom_call.1} parent=1 // pred_fallthru
      _
    // Predicated region
    $region34: #{tpu_custom_call.1} parent=1 // pred_check
      _
    $region35: #{tpu_custom_call.1} parent=1 // pred_check_branch
      %124 = sbr.rel (0) target = $region37
    $region36: #{tpu_custom_call.1} parent=1 // pred_region
      %125 = dma.done [#allocation4], 128
    $region37: #{tpu_custom_call.1} parent=1 // pred_fallthru
      _
    // Predicated region
    $region38: #{tpu_custom_call.1} parent=1 // pred_check
      _
    $region39: #{tpu_custom_call.1} parent=1 // pred_check_branch
      %127 = sbr.rel (0) target = $region41
    $region40: #{tpu_custom_call.1} parent=1 // pred_region
      %128 = dma.done [#allocation9], 128
    $region41: #{tpu_custom_call.1} parent=1 // pred_fallthru
      _
    // Predicated region
    $region42: #{tpu_custom_call.1} parent=1 // pred_check
      _
    $region43: #{tpu_custom_call.1} parent=1 // pred_check_branch
      %130 = sbr.rel (0) target = $region45
    $region44: #{tpu_custom_call.1} parent=1 // pred_region
      %131 = dma.done [#allocation9], 128
    $region45: #{tpu_custom_call.1} parent=1 // pred_fallthru
      _
    %132 = vsyncpa [#allocation3], 1
    %133 = vsyncpa [#allocation6], 1
    %134 = vsyncpa [#allocation4], 1
    %135 = vsyncpa [#allocation9], 1

</llo_original>
